<compile_context>
chip_gen: v7x
topology: tpu7x:2x2x1
jax: 0.10.0
libtpu: 0.0.40
codegen_flags: <defaults>
</compile_context>

<pallas_src>
import functools

import jax
import jax.numpy as jnp
from jax import lax
from jax.experimental import pallas as pl
from jax.experimental.pallas import tpu as pltpu


def _nn_attention_kernel(q_ref, k_ref, v_ref,
                         wq_ref, bq_ref, wk_ref, bk_ref, wv_ref, bv_ref,
                         o_ref, *, matmul_dtype, flatten):
    Bt, Lq, Din = q_ref.shape
    _, Lk, _ = k_ref.shape
    Dout = wq_ref.shape[1]
    mm_dt = jnp.float32 if matmul_dtype is None else matmul_dtype

    # --- Linear projections (one big MXU matmul + one broadcast bias add). --
    def project(x_ref, w_ref, b_ref, L):
        x = x_ref[...]                                   # (Bt, L, Din) f32
        if flatten:
            # L % 8 == 0, so the merge into the sublane dim is a free relayout.
            y = jnp.dot(x.reshape(Bt * L, Din).astype(mm_dt), w_ref[...],
                        preferred_element_type=jnp.float32)
            y = y + b_ref[...]                           # (Bt*L, Dout) + (1, Dout)
            return y.reshape(Bt, L, Dout)
        # Batched fallback for sublane-misaligned L (avoids relayout copies).
        y = lax.dot_general(x.astype(mm_dt), w_ref[...],
                            (((2,), (0,)), ((), ())),
                            preferred_element_type=jnp.float32)
        return y + b_ref[...]

    q = project(q_ref, wq_ref, bq_ref, Lq)               # (Bt, Lq, Dout) f32
    k = project(k_ref, wk_ref, bk_ref, Lk)               # (Bt, Lk, Dout) f32
    v = project(v_ref, wv_ref, bv_ref, Lk)               # (Bt, Lk, Dout) f32

    # --- Logits: einsum('bqd,bkd->bqk') contracting last dims directly. -----
    attn = lax.dot_general(q.astype(mm_dt), k.astype(mm_dt),
                           (((2,), (2,)), ((0,), (0,))),
                           preferred_element_type=jnp.float32)   # (Bt, Lq, Lk)

    # --- Numerically stable softmax over the key axis (all f32). ------------
    m = jnp.max(attn, axis=-1, keepdims=True)
    p = jnp.exp(attn - m)
    s = jnp.sum(p, axis=-1, keepdims=True)
    r = pl.reciprocal(s, approx=True)        # EUP vrcp seed (free slot)
    r = r * (2.0 - s * r)                    # one Newton step -> ~f32 accuracy
    p = p * r

    # --- Weighted sum of values: einsum('bqk,bkd->bqd'). --------------------
    out = lax.dot_general(p.astype(mm_dt), v.astype(mm_dt),
                          (((2,), (1,)), ((0,), (0,))),
                          preferred_element_type=jnp.float32)    # (Bt, Lq, Dout)

    o_ref[...] = out.astype(o_ref.dtype)


def nn_attention(Q, K, V, params, *, batch_tile=None, matmul_dtype=jnp.bfloat16):
    """Q: (B, Lq, Din), K/V: (B, Lk, Din).  params: wq/wk/wv of shape
    (Din, Dout) (already transposed from the torch layout) and bq/bk/bv (Dout,).

    matmul_dtype=jnp.bfloat16 (default): bf16 MXU matmuls with f32 accumulation
    and f32 softmax.  matmul_dtype=None: exact f32 forward semantics."""
    B, Lq, Din = Q.shape
    Bk, Lk, Dk = K.shape
    assert Bk == B and Dk == Din and V.shape == (B, Lk, Din)
    Dout = params["wq"].shape[1]

    f32 = jnp.float32
    w_dt = f32 if matmul_dtype is None else matmul_dtype
    w_bytes = jnp.dtype(w_dt).itemsize

    # --- Batch tile: fill the MXU rows (target Bt*Lq ~ 256), keep grid >= 2
    #     for v7x's two TensorCores, and fit a conservative VMEM budget. ------
    if batch_tile is None:
        batch_tile = max(1, pl.cdiv(256, Lq))
    Bt = max(1, min(batch_tile, B))
    if B >= 2:
        Bt = min(Bt, pl.cdiv(B, 2))          # grid length >= 2

    def vmem_bytes(bt):
        tiles = 2 * bt * (Lq + 2 * Lk) * Din * 4            # dbl-buffered act tiles
        outs = 2 * bt * Lq * Dout * 4                       # dbl-buffered out tiles
        wgts = 2 * 3 * (Din * Dout * w_bytes + Dout * 4)    # weights + biases
        live = (bt * (Lq + 2 * Lk) * Dout + 2 * bt * Lq * Lk) * 4  # q/k/v, attn, p
        return tiles + outs + wgts + live

    VMEM_BUDGET = 40 << 20                   # safe even vs v7x's 64 MiB physical VMEM
    while Bt > 1 and vmem_bytes(Bt) > VMEM_BUDGET:
        Bt //= 2
    est = vmem_bytes(Bt)
    vmem_limit = int(min(2 * est, 96 << 20)) if est > (16 << 20) else None

    B_p = pl.cdiv(B, Bt) * Bt

    # Only the batch dim is ever padded (never features, never Lk).
    Qx, Kx, Vx = Q.astype(f32), K.astype(f32), V.astype(f32)
    if B_p != B:
        pad = ((0, B_p - B), (0, 0), (0, 0))
        Qx, Kx, Vx = jnp.pad(Qx, pad), jnp.pad(Kx, pad), jnp.pad(Vx, pad)

    wq = params["wq"].astype(w_dt)
    wk = params["wk"].astype(w_dt)
    wv = params["wv"].astype(w_dt)
    bq = params["bq"].astype(f32).reshape(1, Dout)
    bk = params["bk"].astype(f32).reshape(1, Dout)
    bv = params["bv"].astype(f32).reshape(1, Dout)

    flatten = (Lq % 8 == 0) and (Lk % 8 == 0)

    grid_spec = pltpu.PrefetchScalarGridSpec(
        num_scalar_prefetch=0,
        grid=(B_p // Bt,),
        in_specs=[
            pl.BlockSpec((Bt, Lq, Din), lambda b: (b, 0, 0)),   # Q tile
            pl.BlockSpec((Bt, Lk, Din), lambda b: (b, 0, 0)),   # K tile
            pl.BlockSpec((Bt, Lk, Din), lambda b: (b, 0, 0)),   # V tile
            pl.BlockSpec((Din, Dout),   lambda b: (0, 0)),      # wq (grid-invariant)
            pl.BlockSpec((1, Dout),     lambda b: (0, 0)),      # bq
            pl.BlockSpec((Din, Dout),   lambda b: (0, 0)),      # wk
            pl.BlockSpec((1, Dout),     lambda b: (0, 0)),      # bk
            pl.BlockSpec((Din, Dout),   lambda b: (0, 0)),      # wv
            pl.BlockSpec((1, Dout),     lambda b: (0, 0)),      # bv
        ],
        out_specs=pl.BlockSpec((Bt, Lq, Dout), lambda b: (b, 0, 0)),
    )

    out = pl.pallas_call(
        functools.partial(_nn_attention_kernel,
                          matmul_dtype=matmul_dtype, flatten=flatten),
        out_shape=jax.ShapeDtypeStruct((B_p, Lq, Dout), f32),
        grid_spec=grid_spec,
        compiler_params=pltpu.CompilerParams(
            dimension_semantics=("parallel",),
            vmem_limit_bytes=vmem_limit),
    )(Qx, Kx, Vx, wq, bq, wk, bk, wv, bv)

    return out if B_p == B else out[:B]


def init_params(key, in_dim, out_dim):
    """Deterministic nn.Linear-style init (uniform +/- 1/sqrt(in_dim))."""
    ks = jax.random.split(key, 6)
    bound = 1.0 / jnp.sqrt(jnp.float32(in_dim))
    u = lambda k, shape: jax.random.uniform(k, shape, jnp.float32, -bound, bound)
    return {
        "wq": u(ks[0], (in_dim, out_dim)), "bq": u(ks[1], (out_dim,)),
        "wk": u(ks[2], (in_dim, out_dim)), "bk": u(ks[3], (out_dim,)),
        "wv": u(ks[4], (in_dim, out_dim)), "bv": u(ks[5], (out_dim,)),
    }


def nn_attention_ref(Q, K, V, params):
    """Pure-JAX f32 reference matching the PyTorch forward."""
    q = Q @ params["wq"] + params["bq"]
    k = K @ params["wk"] + params["bk"]
    v = V @ params["wv"] + params["bv"]
    attn = jnp.einsum("ijk,ilk->ijl", q, k)
    attn_prob = jax.nn.softmax(attn, axis=-1)
    return jnp.einsum("ijk,ikl->ijl", attn_prob, v)


def nn_attention_ref_lowp(Q, K, V, params, mm_dtype):
    """Pure-JAX reference with the same bf16-operand / f32-accumulate matmuls
    the fast kernel path uses (softmax in f32)."""
    f32 = jnp.float32
    c = lambda x: x.astype(mm_dtype)
    q = jnp.dot(c(Q), c(params["wq"]), preferred_element_type=f32) + params["bq"]
    k = jnp.dot(c(K), c(params["wk"]), preferred_element_type=f32) + params["bk"]
    v = jnp.dot(c(V), c(params["wv"]), preferred_element_type=f32) + params["bv"]
    attn = jnp.einsum("bqd,bkd->bqk", c(q), c(k), preferred_element_type=f32)
    p = jax.nn.softmax(attn, axis=-1)
    return jnp.einsum("bqk,bkd->bqd", c(p), c(v), preferred_element_type=f32)


if __name__ == "__main__":
    B, Lq, Lk, Din, Dout = 2, 8, 8, 32, 32

    key = jax.random.PRNGKey(0)
    kq, kk, kv, kp = jax.random.split(key, 4)
    Q = jax.random.normal(kq, (B, Lq, Din), jnp.float32)
    K = jax.random.normal(kk, (B, Lk, Din), jnp.float32)
    V = jax.random.normal(kv, (B, Lk, Din), jnp.float32)
    params = init_params(kp, Din, Dout)

    # Exact-f32 path: matches the PyTorch module numerics to tight tolerance.
    out_f32 = jax.block_until_ready(nn_attention(Q, K, V, params, matmul_dtype=None))
    ref = nn_attention_ref(Q, K, V, params)
    assert out_f32.shape == (B, Lq, Dout)
    assert jnp.allclose(out_f32, ref, atol=1e-4, rtol=1e-4), "f32 path mismatch"

    # Default fast path: bf16 MXU matmuls, f32 accumulation, f32 softmax.
    out_bf16 = jax.block_until_ready(nn_attention(Q, K, V, params))
    ref_bf16 = nn_attention_ref_lowp(Q, K, V, params, jnp.bfloat16)
    assert out_bf16.shape == (B, Lq, Dout)
    assert jnp.allclose(out_bf16, ref_bf16, atol=2e-3, rtol=2e-3), "bf16 path mismatch"

    print("KERNEL_OK")
</pallas_src>

<mosaic_0001>
module attributes {stable_mosaic.version = 11 : i64} {
  func.func @_nn_attention_kernel(%arg0: i32, %arg1: memref<1x8x32xf32, #tpu.memory_space<vmem>>, %arg2: memref<1x8x32xf32, #tpu.memory_space<vmem>>, %arg3: memref<1x8x32xf32, #tpu.memory_space<vmem>>, %arg4: memref<32x32xf32, #tpu.memory_space<vmem>>, %arg5: memref<1x32xf32, #tpu.memory_space<vmem>>, %arg6: memref<32x32xf32, #tpu.memory_space<vmem>>, %arg7: memref<1x32xf32, #tpu.memory_space<vmem>>, %arg8: memref<32x32xf32, #tpu.memory_space<vmem>>, %arg9: memref<1x32xf32, #tpu.memory_space<vmem>>, %arg10: memref<1x8x32xf32, #tpu.memory_space<vmem>>) attributes {dimension_semantics = [#tpu.dimension_semantics<parallel>], iteration_bounds = array<i64: 2>, scalar_prefetch = 0 : i64, scratch_operands = 0 : i64, tpu.core_type = #tpu.core_type<tc>, window_params = [{transform_indices = @transform_0, window_bounds = array<i64: 1, 8, 32>}, {transform_indices = @transform_1, window_bounds = array<i64: 1, 8, 32>}, {transform_indices = @transform_2, window_bounds = array<i64: 1, 8, 32>}, {pipeline_mode = #tpu.pipeline_mode<synchronous>, transform_indices = @transform_3, window_bounds = array<i64: 32, 32>}, {pipeline_mode = #tpu.pipeline_mode<synchronous>, transform_indices = @transform_4, window_bounds = array<i64: 1, 32>}, {pipeline_mode = #tpu.pipeline_mode<synchronous>, transform_indices = @transform_5, window_bounds = array<i64: 32, 32>}, {pipeline_mode = #tpu.pipeline_mode<synchronous>, transform_indices = @transform_6, window_bounds = array<i64: 1, 32>}, {pipeline_mode = #tpu.pipeline_mode<synchronous>, transform_indices = @transform_7, window_bounds = array<i64: 32, 32>}, {pipeline_mode = #tpu.pipeline_mode<synchronous>, transform_indices = @transform_8, window_bounds = array<i64: 1, 32>}, {transform_indices = @transform_9, window_bounds = array<i64: 1, 8, 32>}]} {
    %c0 = arith.constant 0 : index
    %c0_0 = arith.constant 0 : index
    %c0_1 = arith.constant 0 : index
    %0 = vector.load %arg1[%c0, %c0_0, %c0_1] : memref<1x8x32xf32, #tpu.memory_space<vmem>>, vector<1x8x32xf32>
    %1 = vector.shape_cast %0 : vector<1x8x32xf32> to vector<8x32xf32>
    %c0_2 = arith.constant 0 : index
    %c0_3 = arith.constant 0 : index
    %2 = vector.load %arg4[%c0_2, %c0_3] : memref<32x32xf32, #tpu.memory_space<vmem>>, vector<32x32xf32>
    %cst = arith.constant dense<0.000000e+00> : vector<8x32xf32>
    %3 = tpu.matmul %1, %2, %cst {dimension_numbers = #tpu.dot_dimension_numbers<[1], [0], [0], [1], [0, 0, 1, 1], [], []>} : vector<8x32xf32>, vector<32x32xf32>, vector<8x32xf32> -> vector<8x32xf32>
    %c0_4 = arith.constant 0 : index
    %c0_5 = arith.constant 0 : index
    %4 = vector.load %arg5[%c0_4, %c0_5] : memref<1x32xf32, #tpu.memory_space<vmem>>, vector<1x32xf32>
    %5 = vector.broadcast %4 : vector<1x32xf32> to vector<8x32xf32>
    %6 = arith.addf %3, %5 : vector<8x32xf32>
    %7 = vector.shape_cast %6 : vector<8x32xf32> to vector<1x8x32xf32>
    %c0_6 = arith.constant 0 : index
    %c0_7 = arith.constant 0 : index
    %c0_8 = arith.constant 0 : index
    %8 = vector.load %arg2[%c0_6, %c0_7, %c0_8] : memref<1x8x32xf32, #tpu.memory_space<vmem>>, vector<1x8x32xf32>
    %9 = vector.shape_cast %8 : vector<1x8x32xf32> to vector<8x32xf32>
    %c0_9 = arith.constant 0 : index
    %c0_10 = arith.constant 0 : index
    %10 = vector.load %arg6[%c0_9, %c0_10] : memref<32x32xf32, #tpu.memory_space<vmem>>, vector<32x32xf32>
    %cst_11 = arith.constant dense<0.000000e+00> : vector<8x32xf32>
    %11 = tpu.matmul %9, %10, %cst_11 {dimension_numbers = #tpu.dot_dimension_numbers<[1], [0], [0], [1], [0, 0, 1, 1], [], []>} : vector<8x32xf32>, vector<32x32xf32>, vector<8x32xf32> -> vector<8x32xf32>
    %c0_12 = arith.constant 0 : index
    %c0_13 = arith.constant 0 : index
    %12 = vector.load %arg7[%c0_12, %c0_13] : memref<1x32xf32, #tpu.memory_space<vmem>>, vector<1x32xf32>
    %13 = vector.broadcast %12 : vector<1x32xf32> to vector<8x32xf32>
    %14 = arith.addf %11, %13 : vector<8x32xf32>
    %15 = vector.shape_cast %14 : vector<8x32xf32> to vector<1x8x32xf32>
    %c0_14 = arith.constant 0 : index
    %c0_15 = arith.constant 0 : index
    %c0_16 = arith.constant 0 : index
    %16 = vector.load %arg3[%c0_14, %c0_15, %c0_16] : memref<1x8x32xf32, #tpu.memory_space<vmem>>, vector<1x8x32xf32>
    %17 = vector.shape_cast %16 : vector<1x8x32xf32> to vector<8x32xf32>
    %c0_17 = arith.constant 0 : index
    %c0_18 = arith.constant 0 : index
    %18 = vector.load %arg8[%c0_17, %c0_18] : memref<32x32xf32, #tpu.memory_space<vmem>>, vector<32x32xf32>
    %cst_19 = arith.constant dense<0.000000e+00> : vector<8x32xf32>
    %19 = tpu.matmul %17, %18, %cst_19 {dimension_numbers = #tpu.dot_dimension_numbers<[1], [0], [0], [1], [0, 0, 1, 1], [], []>} : vector<8x32xf32>, vector<32x32xf32>, vector<8x32xf32> -> vector<8x32xf32>
    %c0_20 = arith.constant 0 : index
    %c0_21 = arith.constant 0 : index
    %20 = vector.load %arg9[%c0_20, %c0_21] : memref<1x32xf32, #tpu.memory_space<vmem>>, vector<1x32xf32>
    %21 = vector.broadcast %20 : vector<1x32xf32> to vector<8x32xf32>
    %22 = arith.addf %19, %21 : vector<8x32xf32>
    %23 = vector.shape_cast %22 : vector<8x32xf32> to vector<1x8x32xf32>
    %cst_22 = arith.constant dense<0.000000e+00> : vector<1x8x8xf32>
    %24 = tpu.matmul %7, %15, %cst_22 {dimension_numbers = #tpu.dot_dimension_numbers<[2], [2], [1], [1], [0, 0, 0, 1, 1, 1], [0], [0]>} : vector<1x8x32xf32>, vector<1x8x32xf32>, vector<1x8x8xf32> -> vector<1x8x8xf32>
    %cst_23 = arith.constant dense<0xFF800000> : vector<1x8xf32>
    %25 = vector.multi_reduction <maximumf>, %24, %cst_23 [2] : vector<1x8x8xf32> to vector<1x8xf32>
    %26 = vector.shape_cast %25 : vector<1x8xf32> to vector<1x8x1xf32>
    %27 = vector.broadcast %26 : vector<1x8x1xf32> to vector<1x8x8xf32>
    %28 = arith.subf %24, %27 : vector<1x8x8xf32>
    %29 = math.exp %28 : vector<1x8x8xf32>
    %cst_24 = arith.constant dense<0.000000e+00> : vector<1x8xf32>
    %30 = vector.multi_reduction <add>, %29, %cst_24 [2] : vector<1x8x8xf32> to vector<1x8xf32>
    %31 = vector.shape_cast %30 : vector<1x8xf32> to vector<1x8x1xf32>
    %32 = tpu.reciprocal %31 {approx = true} : vector<1x8x1xf32> -> vector<1x8x1xf32>
    %33 = arith.mulf %31, %32 : vector<1x8x1xf32>
    %cst_25 = arith.constant 2.000000e+00 : f32
    %34 = vector.broadcast %cst_25 : f32 to vector<1x8x1xf32>
    %35 = arith.subf %34, %33 : vector<1x8x1xf32>
    %36 = arith.mulf %32, %35 : vector<1x8x1xf32>
    %37 = vector.broadcast %36 : vector<1x8x1xf32> to vector<1x8x8xf32>
    %38 = arith.mulf %29, %37 : vector<1x8x8xf32>
    %cst_26 = arith.constant dense<0.000000e+00> : vector<1x8x32xf32>
    %39 = tpu.matmul %38, %23, %cst_26 {dimension_numbers = #tpu.dot_dimension_numbers<[2], [1], [1], [2], [0, 0, 0, 1, 1, 2], [0], [0]>} : vector<1x8x8xf32>, vector<1x8x32xf32>, vector<1x8x32xf32> -> vector<1x8x32xf32>
    %c0_27 = arith.constant 0 : index
    %c0_28 = arith.constant 0 : index
    %c0_29 = arith.constant 0 : index
    %40 = vector.load %arg10[%c0_27, %c0_28, %c0_29] : memref<1x8x32xf32, #tpu.memory_space<vmem>>, vector<1x8x32xf32>
    tpu.vector_store %arg10[%c0_27, %c0_28, %c0_29], %39 {strides = array<i32>} : memref<1x8x32xf32, #tpu.memory_space<vmem>>, vector<1x8x32xf32>,
    return
  }
  func.func @transform_0(%arg0: i32) -> (i32, i32, i32) {
    %c0_i32 = arith.constant 0 : i32
    %c0_i32_0 = arith.constant 0 : i32
    %c0_i32_1 = arith.constant 0 : i32
    return %arg0, %c0_i32, %c0_i32_0 : i32, i32, i32
  }
  func.func @transform_1(%arg0: i32) -> (i32, i32, i32) {
    %c0_i32 = arith.constant 0 : i32
    %c0_i32_0 = arith.constant 0 : i32
    %c0_i32_1 = arith.constant 0 : i32
    return %arg0, %c0_i32, %c0_i32_0 : i32, i32, i32
  }
  func.func @transform_2(%arg0: i32) -> (i32, i32, i32) {
    %c0_i32 = arith.constant 0 : i32
    %c0_i32_0 = arith.constant 0 : i32
    %c0_i32_1 = arith.constant 0 : i32
    return %arg0, %c0_i32, %c0_i32_0 : i32, i32, i32
  }
  func.func @transform_3(%arg0: i32) -> (i32, i32) {
    %c0_i32 = arith.constant 0 : i32
    %c0_i32_0 = arith.constant 0 : i32
    %c0_i32_1 = arith.constant 0 : i32
    return %c0_i32, %c0_i32_0 : i32, i32
  }
  func.func @transform_4(%arg0: i32) -> (i32, i32) {
    %c0_i32 = arith.constant 0 : i32
    %c0_i32_0 = arith.constant 0 : i32
    %c0_i32_1 = arith.constant 0 : i32
    return %c0_i32, %c0_i32_0 : i32, i32
  }
  func.func @transform_5(%arg0: i32) -> (i32, i32) {
    %c0_i32 = arith.constant 0 : i32
    %c0_i32_0 = arith.constant 0 : i32
    %c0_i32_1 = arith.constant 0 : i32
    return %c0_i32, %c0_i32_0 : i32, i32
  }
  func.func @transform_6(%arg0: i32) -> (i32, i32) {
    %c0_i32 = arith.constant 0 : i32
    %c0_i32_0 = arith.constant 0 : i32
    %c0_i32_1 = arith.constant 0 : i32
    return %c0_i32, %c0_i32_0 : i32, i32
  }
  func.func @transform_7(%arg0: i32) -> (i32, i32) {
    %c0_i32 = arith.constant 0 : i32
    %c0_i32_0 = arith.constant 0 : i32
    %c0_i32_1 = arith.constant 0 : i32
    return %c0_i32, %c0_i32_0 : i32, i32
  }
  func.func @transform_8(%arg0: i32) -> (i32, i32) {
    %c0_i32 = arith.constant 0 : i32
    %c0_i32_0 = arith.constant 0 : i32
    %c0_i32_1 = arith.constant 0 : i32
    return %c0_i32, %c0_i32_0 : i32, i32
  }
  func.func @transform_9(%arg0: i32) -> (i32, i32, i32) {
    %c0_i32 = arith.constant 0 : i32
    %c0_i32_0 = arith.constant 0 : i32
    %c0_i32_1 = arith.constant 0 : i32
    return %arg0, %c0_i32, %c0_i32_0 : i32, i32, i32
  }
}

</mosaic_0001>

<llo_original>
// kernel: tpu_custom_call.1
$region0: #{tpu_custom_call.1}
  #allocation0 [shape = 'u32[]', space=smem, size = 0x4, offset = 0x4, fixed_abs, tag = 'smem constant byte address 0x4 - core index']
  #allocation1 [shape = 'u32[144,128]{1,0:T(1,128)}', space=vmem, size = 0x12000, scoped, tag = 'internal scratch']
  %s0 = inlined_call_operand.hbm [shape: f32[2,8,32], index: 0, kind: input, shape index: {}]
  %s1 = inlined_call_operand.hbm [shape: f32[2,8,32], index: 1, kind: input, shape index: {}]
  %s2 = inlined_call_operand.hbm [shape: f32[2,8,32], index: 2, kind: input, shape index: {}]
  %s3 = inlined_call_operand.hbm [shape: f32[32,32], index: 3, kind: input, shape index: {}]
  %s4 = inlined_call_operand.vmem [shape: f32[1,32], index: 4, kind: input, shape index: {}]
  %s5 = inlined_call_operand.hbm [shape: f32[32,32], index: 5, kind: input, shape index: {}]
  %s6 = inlined_call_operand.vmem [shape: f32[1,32], index: 6, kind: input, shape index: {}]
  %s7 = inlined_call_operand.hbm [shape: f32[32,32], index: 7, kind: input, shape index: {}]
  %s8 = inlined_call_operand.vmem [shape: f32[1,32], index: 8, kind: input, shape index: {}]
  %s9 = inlined_call_operand.hbm [shape: f32[2,8,32], index: 9, kind: output, shape index: {}]
  %s10 = sld [smem:[#allocation0]]
  $region93: #{tpu_custom_call.1} parent=0
    _
  %s12 = ssub.s32 1, %s10
  %s13 = scalar_select 0, %s12, %s10
  $region1: #{tpu_custom_call.1} parent=0
    #allocation2 [shape = 'u8[8192]{0}', space=vmem, size = 0x2000, scoped, tag = 'input window, operand 0']
    #allocation3 [shape = 's32[2]{0}', space=sflag, size = 0x8, scoped, tag = 'scoped memory for tpu_custom_call.1']
    #allocation4 [shape = 's32[2]{0}', space=sflag, size = 0x8, scoped, tag = 'scoped memory for tpu_custom_call.1']
    #allocation5 [shape = 'u8[8192]{0}', space=vmem, size = 0x2000, scoped, tag = 'input window, operand 1']
    #allocation6 [shape = 's32[2]{0}', space=sflag, size = 0x8, scoped, tag = 'scoped memory for tpu_custom_call.1']
    #allocation7 [shape = 'u8[8192]{0}', space=vmem, size = 0x2000, scoped, tag = 'input window, operand 2']
    #allocation8 [shape = 'u8[16384]{0}', space=vmem, size = 0x4000, scoped, tag = 'input window, operand 3, single buffered']
    #allocation9 [shape = 's32[1]{0}', space=sflag, size = 0x4, scoped, tag = 'scoped memory for tpu_custom_call.1']
    #allocation10 [shape = 'u8[16384]{0}', space=vmem, size = 0x4000, scoped, tag = 'input window, operand 5, single buffered']
    #allocation11 [shape = 'u8[16384]{0}', space=vmem, size = 0x4000, scoped, tag = 'input window, operand 7, single buffered']
    #allocation12 [shape = 's32[1]{0}', space=sflag, size = 0x4, scoped, tag = 'scoped memory for tpu_custom_call.1']
    #allocation13 [shape = 'u8[8192]{0}', space=vmem, size = 0x2000, scoped, tag = 'output window, operand 0']
    %14 = vsyncpa [#allocation3], 0
    %s15 = scalar_lea.sflag [#allocation3], 1
    %16 = vsyncpa %s15, 0
    %17 = vsyncpa [#allocation6], 0
    %s18 = scalar_lea.sflag [#allocation6], 1
    %19 = vsyncpa %s18, 0
    %20 = vsyncpa [#allocation9], 0
    %21 = vsyncpa [#allocation12], 0
    %22 = vsyncpa [#allocation4], 0
    %s23 = scalar_lea.sflag [#allocation4], 1
    %24 = vsyncpa %s23, 0
    loop: start=0, step=1, limit=4
    $region2: #{tpu_custom_call.1} parent=1 // loop_pre_header
      _
    $region3: #{tpu_custom_call.1} parent=1 // loop_header
      %s26 = sphi 0, %s30
      %p27 = scmp.ge.s32.totalorder %s26, 4
      %s36 = sphi 0, %s38
      %s39 = sphi 0, %s36
      %s40 = sphi 0, %s39
      %s56 = sphi 0, %s40
      %s62 = sphi 0, %s64
      %s65 = sphi 0, %s62
      %s66 = sphi 0, %s65
      %s82 = sphi 0, %s66
      %s88 = sphi 0, %s90
      %s91 = sphi 0, %s88
      %s92 = sphi 0, %s91
      %s108 = sphi 0, %s92
      %s112 = sphi 0, %s112
      %s114 = sphi 0, %s112
      %s115 = sphi 0, %s114
      %s129 = sphi 0, %s115
      %s133 = sphi 0, %s133
      %s135 = sphi 0, %s133
      %s136 = sphi 0, %s135
      %s150 = sphi 0, %s136
      %s154 = sphi 0, %s154
      %s156 = sphi 0, %s154
      %s157 = sphi 0, %s156
      %s171 = sphi 0, %s157
      %s175 = sphi 0, %s175
      %s177 = sphi 0, %s175
      %s178 = sphi 0, %s177
      %s192 = sphi 0, %s178
      %s196 = sphi 0, %s196
      %s198 = sphi 0, %s196
      %s199 = sphi 0, %s198
      %s213 = sphi 0, %s199
      %s217 = sphi 0, %s217
      %s219 = sphi 0, %s217
      %s220 = sphi 0, %s219
      %s234 = sphi 0, %s220
      %s240 = sphi 0, %s242
      %s243 = sphi 0, %s240
      %s244 = sphi 0, %s243
      %s260 = sphi 0, %s244
    $region4: #{tpu_custom_call.1} parent=1 // loop_header_branch
      %29 = sbr.rel (%p27) target = $region8
    $region5: #{tpu_custom_call.1} parent=1 // loop_body
      %s31 = ssub.s32 %s26, 1
      %s32 = ssub.s32 %s26, 2
      %s33 = sadd.s32 %s26, 1
      %s34 = ssub.s32 %s26, %s33
      %p35 = scmp.eq.s32.totalorder %s34, 0
      %s37 = sadd.s32 %s36, 1
      %s38 = scalar_select %p35, %s36, %s37
      %p41 = pneg %p35
      %p42 = scmp.eq.s32.totalorder %s26, 1
      %p43 = por %p41, %p42
      %p44 = scmp.ne.s32.totalorder %s36, %s39
      %p45 = scmp.eq.s32.totalorder %s26, 0
      %p46 = por %p44, %p45
      %p47 = scmp.ne.s32.totalorder %s36, %s39
      %p48 = scmp.eq.s32.totalorder %s31, 1
      %p49 = por %p47, %p48
      %p50 = scmp.ne.s32.totalorder %s39, %s40
      %p51 = scmp.eq.s32.totalorder %s31, 0
      %p52 = por %p50, %p51
      %p53 = scmp.ne.s32.totalorder %s39, %s40
      %p54 = scmp.eq.s32.totalorder %s32, 1
      %p55 = por %p53, %p54
      %p57 = scmp.ne.s32.totalorder %s40, %s56
      %p58 = scmp.eq.s32.totalorder %s32, 0
      %p59 = por %p57, %p58
      %s60 = ssub.s32 %s26, %s33
      %p61 = scmp.eq.s32.totalorder %s60, 0
      %s63 = sadd.s32 %s62, 1
      %s64 = scalar_select %p61, %s62, %s63
      %p67 = pneg %p61
      %p68 = scmp.eq.s32.totalorder %s26, 1
      %p69 = por %p67, %p68
      %p70 = scmp.ne.s32.totalorder %s62, %s65
      %p71 = scmp.eq.s32.totalorder %s26, 0
      %p72 = por %p70, %p71
      %p73 = scmp.ne.s32.totalorder %s62, %s65
      %p74 = scmp.eq.s32.totalorder %s31, 1
      %p75 = por %p73, %p74
      %p76 = scmp.ne.s32.totalorder %s65, %s66
      %p77 = scmp.eq.s32.totalorder %s31, 0
      %p78 = por %p76, %p77
      %p79 = scmp.ne.s32.totalorder %s65, %s66
      %p80 = scmp.eq.s32.totalorder %s32, 1
      %p81 = por %p79, %p80
      %p83 = scmp.ne.s32.totalorder %s66, %s82
      %p84 = scmp.eq.s32.totalorder %s32, 0
      %p85 = por %p83, %p84
      %s86 = ssub.s32 %s26, %s33
      %p87 = scmp.eq.s32.totalorder %s86, 0
      %s89 = sadd.s32 %s88, 1
      %s90 = scalar_select %p87, %s88, %s89
      %p93 = pneg %p87
      %p94 = scmp.eq.s32.totalorder %s26, 1
      %p95 = por %p93, %p94
      %p96 = scmp.ne.s32.totalorder %s88, %s91
      %p97 = scmp.eq.s32.totalorder %s26, 0
      %p98 = por %p96, %p97
      %p99 = scmp.ne.s32.totalorder %s88, %s91
      %p100 = scmp.eq.s32.totalorder %s31, 1
      %p101 = por %p99, %p100
      %p102 = scmp.ne.s32.totalorder %s91, %s92
      %p103 = scmp.eq.s32.totalorder %s31, 0
      %p104 = por %p102, %p103
      %p105 = scmp.ne.s32.totalorder %s91, %s92
      %p106 = scmp.eq.s32.totalorder %s32, 1
      %p107 = por %p105, %p106
      %p109 = scmp.ne.s32.totalorder %s92, %s108
      %p110 = scmp.eq.s32.totalorder %s32, 0
      %p111 = por %p109, %p110
      %s113 = sadd.s32 %s112, 1
      %p116 = scmp.eq.s32.totalorder %s26, 1
      %p117 = scmp.ne.s32.totalorder %s112, %s114
      %p118 = scmp.eq.s32.totalorder %s26, 0
      %p119 = por %p117, %p118
      %p120 = scmp.ne.s32.totalorder %s112, %s114
      %p121 = scmp.eq.s32.totalorder %s31, 1
      %p122 = por %p120, %p121
      %p123 = scmp.ne.s32.totalorder %s114, %s115
      %p124 = scmp.eq.s32.totalorder %s31, 0
      %p125 = por %p123, %p124
      %p126 = scmp.ne.s32.totalorder %s114, %s115
      %p127 = scmp.eq.s32.totalorder %s32, 1
      %p128 = por %p126, %p127
      %p130 = scmp.ne.s32.totalorder %s115, %s129
      %p131 = scmp.eq.s32.totalorder %s32, 0
      %p132 = por %p130, %p131
      %s134 = sadd.s32 %s133, 1
      %p137 = scmp.eq.s32.totalorder %s26, 1
      %p138 = scmp.ne.s32.totalorder %s133, %s135
      %p139 = scmp.eq.s32.totalorder %s26, 0
      %p140 = por %p138, %p139
      %p141 = scmp.ne.s32.totalorder %s133, %s135
      %p142 = scmp.eq.s32.totalorder %s31, 1
      %p143 = por %p141, %p142
      %p144 = scmp.ne.s32.totalorder %s135, %s136
      %p145 = scmp.eq.s32.totalorder %s31, 0
      %p146 = por %p144, %p145
      %p147 = scmp.ne.s32.totalorder %s135, %s136
      %p148 = scmp.eq.s32.totalorder %s32, 1
      %p149 = por %p147, %p148
      %p151 = scmp.ne.s32.totalorder %s136, %s150
      %p152 = scmp.eq.s32.totalorder %s32, 0
      %p153 = por %p151, %p152
      %s155 = sadd.s32 %s154, 1
      %p158 = scmp.eq.s32.totalorder %s26, 1
      %p159 = scmp.ne.s32.totalorder %s154, %s156
      %p160 = scmp.eq.s32.totalorder %s26, 0
      %p161 = por %p159, %p160
      %p162 = scmp.ne.s32.totalorder %s154, %s156
      %p163 = scmp.eq.s32.totalorder %s31, 1
      %p164 = por %p162, %p163
      %p165 = scmp.ne.s32.totalorder %s156, %s157
      %p166 = scmp.eq.s32.totalorder %s31, 0
      %p167 = por %p165, %p166
      %p168 = scmp.ne.s32.totalorder %s156, %s157
      %p169 = scmp.eq.s32.totalorder %s32, 1
      %p170 = por %p168, %p169
      %p172 = scmp.ne.s32.totalorder %s157, %s171
      %p173 = scmp.eq.s32.totalorder %s32, 0
      %p174 = por %p172, %p173
      %s176 = sadd.s32 %s175, 1
      %p179 = scmp.eq.s32.totalorder %s26, 1
      %p180 = scmp.ne.s32.totalorder %s175, %s177
      %p181 = scmp.eq.s32.totalorder %s26, 0
      %p182 = por %p180, %p181
      %p183 = scmp.ne.s32.totalorder %s175, %s177
      %p184 = scmp.eq.s32.totalorder %s31, 1
      %p185 = por %p183, %p184
      %p186 = scmp.ne.s32.totalorder %s177, %s178
      %p187 = scmp.eq.s32.totalorder %s31, 0
      %p188 = por %p186, %p187
      %p189 = scmp.ne.s32.totalorder %s177, %s178
      %p190 = scmp.eq.s32.totalorder %s32, 1
      %p191 = por %p189, %p190
      %p193 = scmp.ne.s32.totalorder %s178, %s192
      %p194 = scmp.eq.s32.totalorder %s32, 0
      %p195 = por %p193, %p194
      %s197 = sadd.s32 %s196, 1
      %p200 = scmp.eq.s32.totalorder %s26, 1
      %p201 = scmp.ne.s32.totalorder %s196, %s198
      %p202 = scmp.eq.s32.totalorder %s26, 0
      %p203 = por %p201, %p202
      %p204 = scmp.ne.s32.totalorder %s196, %s198
      %p205 = scmp.eq.s32.totalorder %s31, 1
      %p206 = por %p204, %p205
      %p207 = scmp.ne.s32.totalorder %s198, %s199
      %p208 = scmp.eq.s32.totalorder %s31, 0
      %p209 = por %p207, %p208
      %p210 = scmp.ne.s32.totalorder %s198, %s199
      %p211 = scmp.eq.s32.totalorder %s32, 1
      %p212 = por %p210, %p211
      %p214 = scmp.ne.s32.totalorder %s199, %s213
      %p215 = scmp.eq.s32.totalorder %s32, 0
      %p216 = por %p214, %p215
      %s218 = sadd.s32 %s217, 1
      %p221 = scmp.eq.s32.totalorder %s26, 1
      %p222 = scmp.ne.s32.totalorder %s217, %s219
      %p223 = scmp.eq.s32.totalorder %s26, 0
      %p224 = por %p222, %p223
      %p225 = scmp.ne.s32.totalorder %s217, %s219
      %p226 = scmp.eq.s32.totalorder %s31, 1
      %p227 = por %p225, %p226
      %p228 = scmp.ne.s32.totalorder %s219, %s220
      %p229 = scmp.eq.s32.totalorder %s31, 0
      %p230 = por %p228, %p229
      %p231 = scmp.ne.s32.totalorder %s219, %s220
      %p232 = scmp.eq.s32.totalorder %s32, 1
      %p233 = por %p231, %p232
      %p235 = scmp.ne.s32.totalorder %s220, %s234
      %p236 = scmp.eq.s32.totalorder %s32, 0
      %p237 = por %p235, %p236
      %s238 = ssub.s32 %s26, %s33
      %p239 = scmp.eq.s32.totalorder %s238, 0
      %s241 = sadd.s32 %s240, 1
      %s242 = scalar_select %p239, %s240, %s241
      %p245 = pneg %p239
      %p246 = scmp.eq.s32.totalorder %s26, 1
      %p247 = por %p245, %p246
      %p248 = scmp.ne.s32.totalorder %s240, %s243
      %p249 = scmp.eq.s32.totalorder %s26, 0
      %p250 = por %p248, %p249
      %p251 = scmp.ne.s32.totalorder %s240, %s243
      %p252 = scmp.eq.s32.totalorder %s31, 1
      %p253 = por %p251, %p252
      %p254 = scmp.ne.s32.totalorder %s243, %s244
      %p255 = scmp.eq.s32.totalorder %s31, 0
      %p256 = por %p254, %p255
      %p257 = scmp.ne.s32.totalorder %s243, %s244
      %p258 = scmp.eq.s32.totalorder %s32, 1
      %p259 = por %p257, %p258
      %p261 = scmp.ne.s32.totalorder %s244, %s260
      %p262 = scmp.eq.s32.totalorder %s32, 0
      %p263 = por %p261, %p262
      %p264 = scmp.le.s32.totalorder 1, %s26
      %p265 = scmp.lt.s32.totalorder %s26, 3
      %p266 = pnand %p264, %p265
      %p267 = pneg %p266
      // Predicated region
      $region9: #{tpu_custom_call.1} parent=5 // pred_check
        _
      $region10: #{tpu_custom_call.1} parent=5 // pred_check_branch
        %269 = sbr.rel (%p266) target = $region12
      $region11: #{tpu_custom_call.1} parent=5 // pred_region
        %s270 = ssub.s32 %s26, 1
        // Predicated region
        $region13: #{tpu_custom_call.1} parent=11 // pred_check
          %p271 = pneg %p125
        $region14: #{tpu_custom_call.1} parent=11 // pred_check_branch
          %273 = sbr.rel (%p271) target = $region16
        $region15: #{tpu_custom_call.1} parent=11 // pred_region
          %s275 = ssub.s32 512, 512
          %276 = vsyncadd [#allocation9], %s275
          %s277 = sshll.u32 [#allocation8], 4
          %s278 = int_to_ptr.vmem [resolvable:$true] %s277
          %283 = dma.hbm_to_vmem [thread:$0]  %s3, 512, %s278, [#allocation9], 128, 128, 8
        $region16: #{tpu_custom_call.1} parent=11 // pred_fallthru
          _
        // Predicated region
        $region17: #{tpu_custom_call.1} parent=11 // pred_check
          %p284 = pneg %p146
        $region18: #{tpu_custom_call.1} parent=11 // pred_check_branch
          %286 = sbr.rel (%p284) target = $region20
        $region19: #{tpu_custom_call.1} parent=11 // pred_region
          _
        $region20: #{tpu_custom_call.1} parent=11 // pred_fallthru
          _
        // Predicated region
        $region21: #{tpu_custom_call.1} parent=11 // pred_check
          %p287 = pneg %p167
        $region22: #{tpu_custom_call.1} parent=11 // pred_check_branch
          %289 = sbr.rel (%p287) target = $region24
        $region23: #{tpu_custom_call.1} parent=11 // pred_region
          %s291 = ssub.s32 512, 512
          %292 = vsyncadd [#allocation9], %s291
          %s293 = sshll.u32 [#allocation10], 4
          %s294 = int_to_ptr.vmem [resolvable:$true] %s293
          %299 = dma.hbm_to_vmem [thread:$0]  %s5, 512, %s294, [#allocation9], 128, 128, 8
        $region24: #{tpu_custom_call.1} parent=11 // pred_fallthru
          _
        // Predicated region
        $region25: #{tpu_custom_call.1} parent=11 // pred_check
          %p300 = pneg %p188
        $region26: #{tpu_custom_call.1} parent=11 // pred_check_branch
          %302 = sbr.rel (%p300) target = $region28
        $region27: #{tpu_custom_call.1} parent=11 // pred_region
          _
        $region28: #{tpu_custom_call.1} parent=11 // pred_fallthru
          _
        // Predicated region
        $region29: #{tpu_custom_call.1} parent=11 // pred_check
          %p303 = pneg %p209
        $region30: #{tpu_custom_call.1} parent=11 // pred_check_branch
          %305 = sbr.rel (%p303) target = $region32
        $region31: #{tpu_custom_call.1} parent=11 // pred_region
          %s307 = ssub.s32 512, 512
          %308 = vsyncadd [#allocation12], %s307
          %s309 = sshll.u32 [#allocation11], 4
          %s310 = int_to_ptr.vmem [resolvable:$true] %s309
          %315 = dma.hbm_to_vmem [thread:$0]  %s7, 512, %s310, [#allocation12], 128, 128, 8
        $region32: #{tpu_custom_call.1} parent=11 // pred_fallthru
          _
        // Predicated region
        $region33: #{tpu_custom_call.1} parent=11 // pred_check
          %p316 = pneg %p230
        $region34: #{tpu_custom_call.1} parent=11 // pred_check_branch
          %318 = sbr.rel (%p316) target = $region36
        $region35: #{tpu_custom_call.1} parent=11 // pred_region
          _
        $region36: #{tpu_custom_call.1} parent=11 // pred_fallthru
          _
      $region12: #{tpu_custom_call.1} parent=5 // pred_fallthru
        _
      %p319 = scmp.lt.s32.totalorder %s26, 2
      // Predicated region
      $region37: #{tpu_custom_call.1} parent=5 // pred_check
        %p320 = pneg %p319
      $region38: #{tpu_custom_call.1} parent=5 // pred_check_branch
        %322 = sbr.rel (%p320) target = $region40
      $region39: #{tpu_custom_call.1} parent=5 // pred_region
        // Predicated region
        $region41: #{tpu_custom_call.1} parent=39 // pred_check
          %p323 = pneg %p46
        $region42: #{tpu_custom_call.1} parent=39 // pred_check_branch
          %325 = sbr.rel (%p323) target = $region44
        $region43: #{tpu_custom_call.1} parent=39 // pred_region
          %s326 = sand.u32 %s36, 1
          %s327 = scalar_lea.sflag [#allocation3], %s326
          %s328 = sand.u32 %s36, 1
          %s329 = smul.addr %s328, 8
          %s330 = scalar_lea.vmem [#allocation2], %s329
          %s332 = ssub.s32 128, 128
          %333 = vsyncadd %s327, %s332
          %s334 = smul.addr %s26, 128
          %s335 = scalar_lea.hbm %s0, %s334
          %s337 = sshll.u32 %s330, 4
          %s338 = int_to_ptr.vmem [resolvable:$true] %s337
          %340 = dma.hbm_to_vmem [thread:$0]  %s335, 128, %s338, %s327
        $region44: #{tpu_custom_call.1} parent=39 // pred_fallthru
          _
        // Predicated region
        $region45: #{tpu_custom_call.1} parent=39 // pred_check
          %p341 = pneg %p72
        $region46: #{tpu_custom_call.1} parent=39 // pred_check_branch
          %343 = sbr.rel (%p341) target = $region48
        $region47: #{tpu_custom_call.1} parent=39 // pred_region
          %s344 = sand.u32 %s26, 1
          %s345 = scalar_lea.sflag [#allocation6], %s344
          %s346 = sand.u32 %s62, 1
          %s347 = smul.addr %s346, 8
          %s348 = scalar_lea.vmem [#allocation5], %s347
          %s350 = ssub.s32 128, 128
          %351 = vsyncadd %s345, %s350
          %s352 = smul.addr %s26, 128
          %s353 = scalar_lea.hbm %s1, %s352
          %s355 = sshll.u32 %s348, 4
          %s356 = int_to_ptr.vmem [resolvable:$true] %s355
          %358 = dma.hbm_to_vmem [thread:$0]  %s353, 128, %s356, %s345
        $region48: #{tpu_custom_call.1} parent=39 // pred_fallthru
          _
        // Predicated region
        $region49: #{tpu_custom_call.1} parent=39 // pred_check
          %p359 = pneg %p98
        $region50: #{tpu_custom_call.1} parent=39 // pred_check_branch
          %361 = sbr.rel (%p359) target = $region52
        $region51: #{tpu_custom_call.1} parent=39 // pred_region
          %s362 = sand.u32 %s26, 1
          %s363 = scalar_lea.sflag [#allocation6], %s362
          %s364 = sand.u32 %s88, 1
          %s365 = smul.addr %s364, 8
          %s366 = scalar_lea.vmem [#allocation7], %s365
          %s368 = ssub.s32 128, 128
          %369 = vsyncadd %s363, %s368
          %s370 = smul.addr %s26, 128
          %s371 = scalar_lea.hbm %s2, %s370
          %s373 = sshll.u32 %s366, 4
          %s374 = int_to_ptr.vmem [resolvable:$true] %s373
          %376 = dma.hbm_to_vmem [thread:$0]  %s371, 128, %s374, %s363
        $region52: #{tpu_custom_call.1} parent=39 // pred_fallthru
          _
      $region40: #{tpu_custom_call.1} parent=5 // pred_fallthru
        _
      %p377 = scmp.le.s32.totalorder 1, %s26
      %p378 = scmp.lt.s32.totalorder %s26, 3
      %p379 = pnand %p377, %p378
      %p380 = pneg %p379
      // Predicated region
      $region53: #{tpu_custom_call.1} parent=5 // pred_check
        _
      $region54: #{tpu_custom_call.1} parent=5 // pred_check_branch
        %382 = sbr.rel (%p379) target = $region56
      $region55: #{tpu_custom_call.1} parent=5 // pred_region
        %s383 = ssub.s32 %s26, 1
        %s384 = sand.u32 %s39, 1
        %s385 = scalar_lea.sflag [#allocation3], %s384
        %s386 = sand.u32 %s39, 1
        %s387 = smul.addr %s386, 8
        %s388 = scalar_lea.vmem [#allocation2], %s387
        // Predicated region
        $region57: #{tpu_custom_call.1} parent=55 // pred_check
          %p389 = pneg %p52
        $region58: #{tpu_custom_call.1} parent=55 // pred_check_branch
          %391 = sbr.rel (%p389) target = $region60
        $region59: #{tpu_custom_call.1} parent=55 // pred_region
          %392 = dma.done %s385, 128
        $region60: #{tpu_custom_call.1} parent=55 // pred_fallthru
          _
        %s393 = sand.u32 %s31, 1
        %s394 = scalar_lea.sflag [#allocation6], %s393
        %s395 = sand.u32 %s65, 1
        %s396 = smul.addr %s395, 8
        %s397 = scalar_lea.vmem [#allocation5], %s396
        // Predicated region
        $region61: #{tpu_custom_call.1} parent=55 // pred_check
          %p398 = pneg %p78
        $region62: #{tpu_custom_call.1} parent=55 // pred_check_branch
          %400 = sbr.rel (%p398) target = $region64
        $region63: #{tpu_custom_call.1} parent=55 // pred_region
          %401 = dma.done %s394, 128
        $region64: #{tpu_custom_call.1} parent=55 // pred_fallthru
          _
        %s402 = sand.u32 %s31, 1
        %s403 = scalar_lea.sflag [#allocation6], %s402
        %s404 = sand.u32 %s91, 1
        %s405 = smul.addr %s404, 8
        %s406 = scalar_lea.vmem [#allocation7], %s405
        // Predicated region
        $region65: #{tpu_custom_call.1} parent=55 // pred_check
          %p407 = pneg %p104
        $region66: #{tpu_custom_call.1} parent=55 // pred_check_branch
          %409 = sbr.rel (%p407) target = $region68
        $region67: #{tpu_custom_call.1} parent=55 // pred_region
          %410 = dma.done %s403, 128
        $region68: #{tpu_custom_call.1} parent=55 // pred_fallthru
          _
        // Predicated region
        $region69: #{tpu_custom_call.1} parent=55 // pred_check
          %p411 = pneg %p125
        $region70: #{tpu_custom_call.1} parent=55 // pred_check_branch
          %413 = sbr.rel (%p411) target = $region72
        $region71: #{tpu_custom_call.1} parent=55 // pred_region
          %414 = dma.done [#allocation9], 512
        $region72: #{tpu_custom_call.1} parent=55 // pred_fallthru
          _
        // Predicated region
        $region73: #{tpu_custom_call.1} parent=55 // pred_check
          %p415 = pneg %p167
        $region74: #{tpu_custom_call.1} parent=55 // pred_check_branch
          %417 = sbr.rel (%p415) target = $region76
        $region75: #{tpu_custom_call.1} parent=55 // pred_region
          %418 = dma.done [#allocation9], 512
        $region76: #{tpu_custom_call.1} parent=55 // pred_fallthru
          _
        // Predicated region
        $region77: #{tpu_custom_call.1} parent=55 // pred_check
          %p419 = pneg %p209
        $region78: #{tpu_custom_call.1} parent=55 // pred_check_branch
          %421 = sbr.rel (%p419) target = $region80
        $region79: #{tpu_custom_call.1} parent=55 // pred_region
          %422 = dma.done [#allocation12], 512
        $region80: #{tpu_custom_call.1} parent=55 // pred_fallthru
          _
        %s423 = sand.u32 %s39, 1
        %s424 = scalar_lea.sflag [#allocation3], %s423
        %s425 = sand.u32 %s39, 1
        %s426 = smul.addr %s425, 8
        %s427 = scalar_lea.vmem [#allocation2], %s426
        %p428 = pneg %p52
        %p429 = pneg %p49
        %s430 = sand.u32 %s31, 1
        %s431 = scalar_lea.sflag [#allocation6], %s430
        %s432 = sand.u32 %s65, 1
        %s433 = smul.addr %s432, 8
        %s434 = scalar_lea.vmem [#allocation5], %s433
        %p435 = pneg %p78
        %p436 = pneg %p75
        %s437 = sand.u32 %s31, 1
        %s438 = scalar_lea.sflag [#allocation6], %s437
        %s439 = sand.u32 %s91, 1
        %s440 = smul.addr %s439, 8
        %s441 = scalar_lea.vmem [#allocation7], %s440
        %p442 = pneg %p104
        %p443 = pneg %p101
        %p444 = pneg %p125
        %p445 = pneg %p122
        %p446 = pneg %p146
        %p447 = pneg %p143
        %p448 = pneg %p167
        %p449 = pneg %p164
        %p450 = pneg %p188
        %p451 = pneg %p185
        %p452 = pneg %p209
        %p453 = pneg %p206
        %p454 = pneg %p230
        %p455 = pneg %p227
        %p456 = pneg %p256
        %p457 = pneg %p253
        %s458 = sand.u32 %s243, 1
        %s459 = scalar_lea.sflag [#allocation4], %s458
        %s460 = sand.u32 %s243, 1
        %s461 = smul.addr %s460, 8
        %s462 = scalar_lea.vmem [#allocation13], %s461
        %v463 = vld [vmem:[%s388] sm:$0xff]
        %v464 = vld [vmem:[#allocation8] sm:$0xff]
        %v465 = vld [vmem:[#allocation8 + $0x8] sm:$0xff]
        %v466 = vld [vmem:[#allocation8 + $0x10] sm:$0xff]
        %v467 = vld [vmem:[#allocation8 + $0x18] sm:$0xff]
        %v468 = vld [vmem:[%s4] sm:$0x1]
        %v470 = vlaneseq
        %v471 = vshrl.u32 %v470, 7
        %v472 = vsub.s32 0, %v471
        %v473 = vrot.slane %v468, %v472
        %vm475 = vcmask 261120
        %v477 = vsel %vm475, %v463, 0
        %479 = vmatprep.subr.mxu0 0.0
        %480 = vmatpush1.msra.mxu0 %v464
        %481 = vmatprep.subr.mxu0 0.0
        %482 = vmatpush1.msra.mxu0 %v465
        %483 = vmatprep.subr.mxu0 0.0
        %484 = vmatpush1.msra.mxu0 %v466
        %485 = vmatprep.subr.mxu0 0.0
        %486 = vmatpush1.msra.mxu0 %v467
        %487 = vmatprep.subr.mxu0 0.0
        %488 = vmatpush1.msra.mxu0 0.0
        %489 = vmatprep.subr.mxu0 0.0
        %490 = vmatpush1.msra.mxu0 0.0
        %491 = vmatprep.subr.mxu0 0.0
        %492 = vmatpush1.msra.mxu0 0.0
        %493 = vmatprep.subr.mxu0 0.0
        %494 = vmatpush1.msra.mxu0 0.0
        %495 = vmatprep.subr.mxu0 0.0
        %496 = vmatpush1.msra.mxu0 0.0
        %497 = vmatprep.subr.mxu0 0.0
        %498 = vmatpush1.msra.mxu0 0.0
        %499 = vmatprep.subr.mxu0 0.0
        %500 = vmatpush1.msra.mxu0 0.0
        %501 = vmatprep.subr.mxu0 0.0
        %502 = vmatpush1.msra.mxu0 0.0
        %503 = vmatprep.subr.mxu0 0.0
        %504 = vmatpush1.msra.mxu0 0.0
        %505 = vmatprep.subr.mxu0 0.0
        %506 = vmatpush1.msra.mxu0 0.0
        %507 = vmatprep.subr.mxu0 0.0
        %508 = vmatpush1.msra.mxu0 0.0
        %509 = vmatprep.subr.mxu0 0.0
        %510 = vmatpush1.msra.mxu0 0.0
        %511 = vmatprep.subr.mxu0 0.0
        %512 = vmatpush1.msra.mxu0 0.0
        %513 = vmatprep.subr.mxu0 0.0
        %514 = vmatpush1.msra.mxu0 0.0
        %515 = vmatprep.subr.mxu0 0.0
        %516 = vmatpush1.msra.mxu0 0.0
        %517 = vmatprep.subr.mxu0 0.0
        %518 = vmatpush1.msra.mxu0 0.0
        %519 = vmatprep.subr.mxu0 0.0
        %520 = vmatpush1.msra.mxu0 0.0
        %521 = vmatprep.subr.mxu0 0.0
        %522 = vmatpush1.msra.mxu0 0.0
        %523 = vmatprep.subr.mxu0 0.0
        %524 = vmatpush1.msra.mxu0 0.0
        %525 = vmatprep.subr.mxu0 0.0
        %526 = vmatpush1.msra.mxu0 0.0
        %527 = vmatprep.subr.mxu0 0.0
        %528 = vmatpush1.msra.mxu0 0.0
        %529 = vmatprep.subr.mxu0 0.0
        %530 = vmatpush1.msra.mxu0 0.0
        %531 = vmatprep.subr.mxu0 0.0
        %532 = vmatpush1.msra.mxu0 0.0
        %533 = vmatprep.subr.mxu0 0.0
        %534 = vmatpush1.msra.mxu0 0.0
        %535 = vmatprep.subr.mxu0 0.0
        %536 = vmatpush1.msra.mxu0 0.0
        %537 = vmatprep.subr.mxu0 0.0
        %538 = vmatpush1.msra.mxu0 0.0
        %539 = vmatprep.subr.mxu0 0.0
        %540 = vmatpush1.msra.mxu0 0.0
        %541 = vmatprep.subr.mxu0 0.0
        %542 = vmatpush1.msra.mxu0 0.0
        %543 = vmatprep.mubr.f32.mxu0 0.0
        %544 = vmatmul.mubr.f32.gmra.mrb[0].mxu0 %v477
        %v545 = vpop.f32.mrb[0].mxu0
        %v546 = vadd.f32 %v473, %v545
        %v547 = vpop.f32.mrb[0].mxu0
        %548 = vdwg.mxu0
        %v549 = vld [vmem:[%s397] sm:$0xff]
        %v550 = vld [vmem:[#allocation10] sm:$0xff]
        %v551 = vld [vmem:[#allocation10 + $0x8] sm:$0xff]
        %v552 = vld [vmem:[#allocation10 + $0x10] sm:$0xff]
        %v553 = vld [vmem:[#allocation10 + $0x18] sm:$0xff]
        %v554 = vld [vmem:[%s6] sm:$0x1]
        %v556 = vlaneseq
        %v557 = vshrl.u32 %v556, 7
        %v558 = vsub.s32 0, %v557
        %v559 = vrot.slane %v554, %v558
        %v562 = vsel %vm475, %v549, 0
        %564 = vmatprep.subr.mxu0 0.0
        %565 = vmatpush1.msra.mxu0 %v550
        %566 = vmatprep.subr.mxu0 0.0
        %567 = vmatpush1.msra.mxu0 %v551
        %568 = vmatprep.subr.mxu0 0.0
        %569 = vmatpush1.msra.mxu0 %v552
        %570 = vmatprep.subr.mxu0 0.0
        %571 = vmatpush1.msra.mxu0 %v553
        %572 = vmatprep.subr.mxu0 0.0
        %573 = vmatpush1.msra.mxu0 0.0
        %574 = vmatprep.subr.mxu0 0.0
        %575 = vmatpush1.msra.mxu0 0.0
        %576 = vmatprep.subr.mxu0 0.0
        %577 = vmatpush1.msra.mxu0 0.0
        %578 = vmatprep.subr.mxu0 0.0
        %579 = vmatpush1.msra.mxu0 0.0
        %580 = vmatprep.subr.mxu0 0.0
        %581 = vmatpush1.msra.mxu0 0.0
        %582 = vmatprep.subr.mxu0 0.0
        %583 = vmatpush1.msra.mxu0 0.0
        %584 = vmatprep.subr.mxu0 0.0
        %585 = vmatpush1.msra.mxu0 0.0
        %586 = vmatprep.subr.mxu0 0.0
        %587 = vmatpush1.msra.mxu0 0.0
        %588 = vmatprep.subr.mxu0 0.0
        %589 = vmatpush1.msra.mxu0 0.0
        %590 = vmatprep.subr.mxu0 0.0
        %591 = vmatpush1.msra.mxu0 0.0
        %592 = vmatprep.subr.mxu0 0.0
        %593 = vmatpush1.msra.mxu0 0.0
        %594 = vmatprep.subr.mxu0 0.0
        %595 = vmatpush1.msra.mxu0 0.0
        %596 = vmatprep.subr.mxu0 0.0
        %597 = vmatpush1.msra.mxu0 0.0
        %598 = vmatprep.subr.mxu0 0.0
        %599 = vmatpush1.msra.mxu0 0.0
        %600 = vmatprep.subr.mxu0 0.0
        %601 = vmatpush1.msra.mxu0 0.0
        %602 = vmatprep.subr.mxu0 0.0
        %603 = vmatpush1.msra.mxu0 0.0
        %604 = vmatprep.subr.mxu0 0.0
        %605 = vmatpush1.msra.mxu0 0.0
        %606 = vmatprep.subr.mxu0 0.0
        %607 = vmatpush1.msra.mxu0 0.0
        %608 = vmatprep.subr.mxu0 0.0
        %609 = vmatpush1.msra.mxu0 0.0
        %610 = vmatprep.subr.mxu0 0.0
        %611 = vmatpush1.msra.mxu0 0.0
        %612 = vmatprep.subr.mxu0 0.0
        %613 = vmatpush1.msra.mxu0 0.0
        %614 = vmatprep.subr.mxu0 0.0
        %615 = vmatpush1.msra.mxu0 0.0
        %616 = vmatprep.subr.mxu0 0.0
        %617 = vmatpush1.msra.mxu0 0.0
        %618 = vmatprep.subr.mxu0 0.0
        %619 = vmatpush1.msra.mxu0 0.0
        %620 = vmatprep.subr.mxu0 0.0
        %621 = vmatpush1.msra.mxu0 0.0
        %622 = vmatprep.subr.mxu0 0.0
        %623 = vmatpush1.msra.mxu0 0.0
        %624 = vmatprep.subr.mxu0 0.0
        %625 = vmatpush1.msra.mxu0 0.0
        %626 = vmatprep.subr.mxu0 0.0
        %627 = vmatpush1.msra.mxu0 0.0
        %628 = vmatprep.mubr.f32.mxu0 0.0
        %629 = vmatmul.mubr.f32.gmra.mrb[0].mxu0 %v562
        %v630 = vpop.f32.mrb[0].mxu0
        %v631 = vadd.f32 %v559, %v630
        %v632 = vpop.f32.mrb[0].mxu0
        %633 = vdwg.mxu0
        %v634 = vld [vmem:[%s406] sm:$0xff]
        %v635 = vld [vmem:[#allocation11] sm:$0xff]
        %v636 = vld [vmem:[#allocation11 + $0x8] sm:$0xff]
        %v637 = vld [vmem:[#allocation11 + $0x10] sm:$0xff]
        %v638 = vld [vmem:[#allocation11 + $0x18] sm:$0xff]
        %v639 = vld [vmem:[%s8] sm:$0x1]
        %v641 = vlaneseq
        %v642 = vshrl.u32 %v641, 7
        %v643 = vsub.s32 0, %v642
        %v644 = vrot.slane %v639, %v643
        %v647 = vsel %vm475, %v634, 0
        %649 = vmatprep.subr.mxu0 0.0
        %650 = vmatpush1.msra.mxu0 %v635
        %651 = vmatprep.subr.mxu0 0.0
        %652 = vmatpush1.msra.mxu0 %v636
        %653 = vmatprep.subr.mxu0 0.0
        %654 = vmatpush1.msra.mxu0 %v637
        %655 = vmatprep.subr.mxu0 0.0
        %656 = vmatpush1.msra.mxu0 %v638
        %657 = vmatprep.subr.mxu0 0.0
        %658 = vmatpush1.msra.mxu0 0.0
        %659 = vmatprep.subr.mxu0 0.0
        %660 = vmatpush1.msra.mxu0 0.0
        %661 = vmatprep.subr.mxu0 0.0
        %662 = vmatpush1.msra.mxu0 0.0
        %663 = vmatprep.subr.mxu0 0.0
        %664 = vmatpush1.msra.mxu0 0.0
        %665 = vmatprep.subr.mxu0 0.0
        %666 = vmatpush1.msra.mxu0 0.0
        %667 = vmatprep.subr.mxu0 0.0
        %668 = vmatpush1.msra.mxu0 0.0
        %669 = vmatprep.subr.mxu0 0.0
        %670 = vmatpush1.msra.mxu0 0.0
        %671 = vmatprep.subr.mxu0 0.0
        %672 = vmatpush1.msra.mxu0 0.0
        %673 = vmatprep.subr.mxu0 0.0
        %674 = vmatpush1.msra.mxu0 0.0
        %675 = vmatprep.subr.mxu0 0.0
        %676 = vmatpush1.msra.mxu0 0.0
        %677 = vmatprep.subr.mxu0 0.0
        %678 = vmatpush1.msra.mxu0 0.0
        %679 = vmatprep.subr.mxu0 0.0
        %680 = vmatpush1.msra.mxu0 0.0
        %681 = vmatprep.subr.mxu0 0.0
        %682 = vmatpush1.msra.mxu0 0.0
        %683 = vmatprep.subr.mxu0 0.0
        %684 = vmatpush1.msra.mxu0 0.0
        %685 = vmatprep.subr.mxu0 0.0
        %686 = vmatpush1.msra.mxu0 0.0
        %687 = vmatprep.subr.mxu0 0.0
        %688 = vmatpush1.msra.mxu0 0.0
        %689 = vmatprep.subr.mxu0 0.0
        %690 = vmatpush1.msra.mxu0 0.0
        %691 = vmatprep.subr.mxu0 0.0
        %692 = vmatpush1.msra.mxu0 0.0
        %693 = vmatprep.subr.mxu0 0.0
        %694 = vmatpush1.msra.mxu0 0.0
        %695 = vmatprep.subr.mxu0 0.0
        %696 = vmatpush1.msra.mxu0 0.0
        %697 = vmatprep.subr.mxu0 0.0
        %698 = vmatpush1.msra.mxu0 0.0
        %699 = vmatprep.subr.mxu0 0.0
        %700 = vmatpush1.msra.mxu0 0.0
        %701 = vmatprep.subr.mxu0 0.0
        %702 = vmatpush1.msra.mxu0 0.0
        %703 = vmatprep.subr.mxu0 0.0
        %704 = vmatpush1.msra.mxu0 0.0
        %705 = vmatprep.subr.mxu0 0.0
        %706 = vmatpush1.msra.mxu0 0.0
        %707 = vmatprep.subr.mxu0 0.0
        %708 = vmatpush1.msra.mxu0 0.0
        %709 = vmatprep.subr.mxu0 0.0
        %710 = vmatpush1.msra.mxu0 0.0
        %711 = vmatprep.subr.mxu0 0.0
        %712 = vmatpush1.msra.mxu0 0.0
        %713 = vmatprep.mubr.f32.mxu0 0.0
        %714 = vmatmul.mubr.f32.gmra.mrb[0].mxu0 %v647
        %v715 = vpop.f32.mrb[0].mxu0
        %v716 = vadd.f32 %v644, %v715
        %v717 = vpop.f32.mrb[0].mxu0
        %718 = vdwg.mxu0
        %v720 = vsel %vm475, %v546, 0
        %v723 = vsel %vm475, %v631, 0
        %725 = vmatprep.subr.mxu0 0.0
        %726 = vmatpush1.xpose.msra.mxu0 %v723
        %727 = vmatprep.subr.mxu0 0.0
        %728 = vmatpush1.xpose.msra.mxu0 0.0
        %729 = vmatprep.subr.mxu0 0.0
        %730 = vmatpush1.xpose.msra.mxu0 0.0
        %731 = vmatprep.subr.mxu0 0.0
        %732 = vmatpush1.xpose.msra.mxu0 0.0
        %733 = vmatprep.subr.mxu0 0.0
        %734 = vmatpush1.xpose.msra.mxu0 0.0
        %735 = vmatprep.subr.mxu0 0.0
        %736 = vmatpush1.xpose.msra.mxu0 0.0
        %737 = vmatprep.subr.mxu0 0.0
        %738 = vmatpush1.xpose.msra.mxu0 0.0
        %739 = vmatprep.subr.mxu0 0.0
        %740 = vmatpush1.xpose.msra.mxu0 0.0
        %741 = vmatprep.subr.mxu0 0.0
        %742 = vmatpush1.xpose.msra.mxu0 0.0
        %743 = vmatprep.subr.mxu0 0.0
        %744 = vmatpush1.xpose.msra.mxu0 0.0
        %745 = vmatprep.subr.mxu0 0.0
        %746 = vmatpush1.xpose.msra.mxu0 0.0
        %747 = vmatprep.subr.mxu0 0.0
        %748 = vmatpush1.xpose.msra.mxu0 0.0
        %749 = vmatprep.subr.mxu0 0.0
        %750 = vmatpush1.xpose.msra.mxu0 0.0
        %751 = vmatprep.subr.mxu0 0.0
        %752 = vmatpush1.xpose.msra.mxu0 0.0
        %753 = vmatprep.subr.mxu0 0.0
        %754 = vmatpush1.xpose.msra.mxu0 0.0
        %755 = vmatprep.subr.mxu0 0.0
        %756 = vmatpush1.xpose.msra.mxu0 0.0
        %757 = vmatprep.subr.mxu0 0.0
        %758 = vmatpush1.xpose.msra.mxu0 0.0
        %759 = vmatprep.subr.mxu0 0.0
        %760 = vmatpush1.xpose.msra.mxu0 0.0
        %761 = vmatprep.subr.mxu0 0.0
        %762 = vmatpush1.xpose.msra.mxu0 0.0
        %763 = vmatprep.subr.mxu0 0.0
        %764 = vmatpush1.xpose.msra.mxu0 0.0
        %765 = vmatprep.subr.mxu0 0.0
        %766 = vmatpush1.xpose.msra.mxu0 0.0
        %767 = vmatprep.subr.mxu0 0.0
        %768 = vmatpush1.xpose.msra.mxu0 0.0
        %769 = vmatprep.subr.mxu0 0.0
        %770 = vmatpush1.xpose.msra.mxu0 0.0
        %771 = vmatprep.subr.mxu0 0.0
        %772 = vmatpush1.xpose.msra.mxu0 0.0
        %773 = vmatprep.subr.mxu0 0.0
        %774 = vmatpush1.xpose.msra.mxu0 0.0
        %775 = vmatprep.subr.mxu0 0.0
        %776 = vmatpush1.xpose.msra.mxu0 0.0
        %777 = vmatprep.subr.mxu0 0.0
        %778 = vmatpush1.xpose.msra.mxu0 0.0
        %779 = vmatprep.subr.mxu0 0.0
        %780 = vmatpush1.xpose.msra.mxu0 0.0
        %781 = vmatprep.subr.mxu0 0.0
        %782 = vmatpush1.xpose.msra.mxu0 0.0
        %783 = vmatprep.subr.mxu0 0.0
        %784 = vmatpush1.xpose.msra.mxu0 0.0
        %785 = vmatprep.subr.mxu0 0.0
        %786 = vmatpush1.xpose.msra.mxu0 0.0
        %787 = vmatprep.subr.mxu0 0.0
        %788 = vmatpush1.xpose.msra.mxu0 0.0
        %789 = vmatprep.mubr.f32.mxu0 0.0
        %790 = vmatmul.mubr.f32.gmra.mrb[0].mxu0 %v720
        %v791 = vpop.f32.mrb[0].mxu0
        %v792 = vadd.f32 0.0, %v791
        %v793 = vpop.f32.mrb[0].mxu0
        %794 = vdwg.mxu0
        %vm795 = vcmask 64512
        %v796 = vsel %vm795, %v792, -inf
        %797 = vmax.xlane.f32.xlu0 %v796
        %v798 = vpop.xlane.xlu0 %797
        %v799 = vsub.f32 %v792, %v798
        %v800 = vmul.f32 %v799, 1.442695
        %v801 = vpow.pop %v800
        %v802 = vsel %vm795, %v801, 0.0
        %803 = vadd.xlane.f32.xlu0 %v802
        %v804 = vpop.xlane.xlu0 %803
        %v805 = vrcp.pop %v804
        %v806 = vmul.f32 %v804, %v805
        %v807 = vsub.f32 2.0, %v806
        %v808 = vmul.f32 %v805, %v807
        %v809 = vmul.f32 %v801, %v808
        %v811 = vsel %vm795, %v809, 0
        %813 = vmatprep.subr.mxu0 0.0
        %814 = vmatpush1.msra.mxu0 %v716
        %815 = vmatprep.subr.mxu0 0.0
        %816 = vmatpush1.msra.mxu0 0.0
        %817 = vmatprep.subr.mxu0 0.0
        %818 = vmatpush1.msra.mxu0 0.0
        %819 = vmatprep.subr.mxu0 0.0
        %820 = vmatpush1.msra.mxu0 0.0
        %821 = vmatprep.subr.mxu0 0.0
        %822 = vmatpush1.msra.mxu0 0.0
        %823 = vmatprep.subr.mxu0 0.0
        %824 = vmatpush1.msra.mxu0 0.0
        %825 = vmatprep.subr.mxu0 0.0
        %826 = vmatpush1.msra.mxu0 0.0
        %827 = vmatprep.subr.mxu0 0.0
        %828 = vmatpush1.msra.mxu0 0.0
        %829 = vmatprep.subr.mxu0 0.0
        %830 = vmatpush1.msra.mxu0 0.0
        %831 = vmatprep.subr.mxu0 0.0
        %832 = vmatpush1.msra.mxu0 0.0
        %833 = vmatprep.subr.mxu0 0.0
        %834 = vmatpush1.msra.mxu0 0.0
        %835 = vmatprep.subr.mxu0 0.0
        %836 = vmatpush1.msra.mxu0 0.0
        %837 = vmatprep.subr.mxu0 0.0
        %838 = vmatpush1.msra.mxu0 0.0
        %839 = vmatprep.subr.mxu0 0.0
        %840 = vmatpush1.msra.mxu0 0.0
        %841 = vmatprep.subr.mxu0 0.0
        %842 = vmatpush1.msra.mxu0 0.0
        %843 = vmatprep.subr.mxu0 0.0
        %844 = vmatpush1.msra.mxu0 0.0
        %845 = vmatprep.subr.mxu0 0.0
        %846 = vmatpush1.msra.mxu0 0.0
        %847 = vmatprep.subr.mxu0 0.0
        %848 = vmatpush1.msra.mxu0 0.0
        %849 = vmatprep.subr.mxu0 0.0
        %850 = vmatpush1.msra.mxu0 0.0
        %851 = vmatprep.subr.mxu0 0.0
        %852 = vmatpush1.msra.mxu0 0.0
        %853 = vmatprep.subr.mxu0 0.0
        %854 = vmatpush1.msra.mxu0 0.0
        %855 = vmatprep.subr.mxu0 0.0
        %856 = vmatpush1.msra.mxu0 0.0
        %857 = vmatprep.subr.mxu0 0.0
        %858 = vmatpush1.msra.mxu0 0.0
        %859 = vmatprep.subr.mxu0 0.0
        %860 = vmatpush1.msra.mxu0 0.0
        %861 = vmatprep.subr.mxu0 0.0
        %862 = vmatpush1.msra.mxu0 0.0
        %863 = vmatprep.subr.mxu0 0.0
        %864 = vmatpush1.msra.mxu0 0.0
        %865 = vmatprep.subr.mxu0 0.0
        %866 = vmatpush1.msra.mxu0 0.0
        %867 = vmatprep.subr.mxu0 0.0
        %868 = vmatpush1.msra.mxu0 0.0
        %869 = vmatprep.subr.mxu0 0.0
        %870 = vmatpush1.msra.mxu0 0.0
        %871 = vmatprep.subr.mxu0 0.0
        %872 = vmatpush1.msra.mxu0 0.0
        %873 = vmatprep.subr.mxu0 0.0
        %874 = vmatpush1.msra.mxu0 0.0
        %875 = vmatprep.subr.mxu0 0.0
        %876 = vmatpush1.msra.mxu0 0.0
        %877 = vmatprep.mubr.f32.mxu0 0.0
        %878 = vmatmul.mubr.f32.gmra.mrb[0].mxu0 %v811
        %v879 = vpop.f32.mrb[0].mxu0
        %v880 = vadd.f32 0.0, %v879
        %v881 = vpop.f32.mrb[0].mxu0
        %882 = vdwg.mxu0
        %883 = vst.msk [vmem:[%s462] sm:$0xff] %vm475, %v880
        %s884 = sand.u32 %s243, 1
        %s885 = scalar_lea.sflag [#allocation4], %s884
        %s886 = sand.u32 %s243, 1
        %s887 = smul.addr %s886, 8
        %s888 = scalar_lea.vmem [#allocation13], %s887
        // Predicated region
        $region81: #{tpu_custom_call.1} parent=55 // pred_check
          %p889 = pneg %p253
        $region82: #{tpu_custom_call.1} parent=55 // pred_check_branch
          %891 = sbr.rel (%p889) target = $region84
        $region83: #{tpu_custom_call.1} parent=55 // pred_region
          %s893 = ssub.s32 128, 128
          %894 = vsyncadd %s885, %s893
          %s895 = smul.addr %s31, 128
          %s896 = scalar_lea.hbm %s9, %s895
          %s898 = sshll.u32 %s888, 4
          %s899 = int_to_ptr.vmem [resolvable:$true] %s898
          %901 = dma.vmem_to_hbm [thread:$0]  %s899, 128, %s896, %s885
        $region84: #{tpu_custom_call.1} parent=55 // pred_fallthru
          _
      $region56: #{tpu_custom_call.1} parent=5 // pred_fallthru
        _
      %p902 = scmp.le.s32.totalorder 2, %s26
      // Predicated region
      $region85: #{tpu_custom_call.1} parent=5 // pred_check
        %p903 = pneg %p902
      $region86: #{tpu_custom_call.1} parent=5 // pred_check_branch
        %905 = sbr.rel (%p903) target = $region88
      $region87: #{tpu_custom_call.1} parent=5 // pred_region
        %s906 = ssub.s32 %s26, 2
        // Predicated region
        $region89: #{tpu_custom_call.1} parent=87 // pred_check
          %p907 = pneg %p259
        $region90: #{tpu_custom_call.1} parent=87 // pred_check_branch
          %909 = sbr.rel (%p907) target = $region92
        $region91: #{tpu_custom_call.1} parent=87 // pred_region
          %s910 = sand.u32 %s244, 1
          %s911 = scalar_lea.sflag [#allocation4], %s910
          %s912 = sand.u32 %s244, 1
          %s913 = smul.addr %s912, 8
          %s914 = scalar_lea.vmem [#allocation13], %s913
          %915 = dma.done %s911, 128
        $region92: #{tpu_custom_call.1} parent=87 // pred_fallthru
          _
      $region88: #{tpu_custom_call.1} parent=5 // pred_fallthru
        _
    $region6: #{tpu_custom_call.1} parent=1 // loop_footer
      %s30 = sadd.s32 1, %s26
    $region7: #{tpu_custom_call.1} parent=1 // loop_footer_branch
      %25 = sbr.rel target = $region3
    $region8: #{tpu_custom_call.1} parent=1 // loop_exit
      _
    %916 = vsyncpa [#allocation3], 1
    %s917 = scalar_lea.sflag [#allocation3], 1
    %918 = vsyncpa %s917, 1
    %919 = vsyncpa [#allocation6], 1
    %s920 = scalar_lea.sflag [#allocation6], 1
    %921 = vsyncpa %s920, 1
    %922 = vsyncpa [#allocation9], 1
    %923 = vsyncpa [#allocation12], 1
    %924 = vsyncpa [#allocation4], 1
    %s925 = scalar_lea.sflag [#allocation4], 1
    %926 = vsyncpa %s925, 1

</llo_original>
